<compile_context>
chip_gen: v7x
topology: tpu7x:2x2x1
jax: 0.10.0
libtpu: 0.0.40
codegen_flags: <defaults>
</compile_context>

<pallas_src>
import functools
import math

import jax
import jax.numpy as jnp
from jax.experimental import pallas as pl
from jax.experimental.pallas import tpu as pltpu


_UNROLL_MAX = 32   # static-unroll threshold for the D sweep


def _round_up(a: int, b: int) -> int:
    return -(-a // b) * b


# ---------------------------------------------------------------------------
# Pallas kernel
# ---------------------------------------------------------------------------

def _sparsemax_kernel(x_ref, o_ref, *, d: int):
    """Sparsemax along the sublane axis of a (d, mt) lane-dense tile.

    x_ref / o_ref: (d, mt) tiles in the caller's dtype.  Every lane (column)
    is an independent sparsemax problem over the d sublane rows.  Lanes past
    the real array extent (ragged last tile) compute garbage that Pallas
    discards when storing the partial output block.
    """
    x = x_ref[...].astype(jnp.float32)                       # (d, mt)
    zmax = jnp.max(x, axis=0, keepdims=True)                 # (1, mt)
    z = x - zmax                                             # shift-invariant

    def sweep_step(l, carry):
        r, cs = carry
        # Row l re-read from the VMEM block ref (vld slot) and re-shifted,
        # instead of slicing the big register-resident z value.
        # TODO(synk): try a stride-0 sublane-broadcast load
        # (x_ref[pl.ds(l, d, stride=0), :]) if the bundle dump shows the
        # sublane broadcast on the critical path (expected 5-15%).
        zl = x_ref[pl.ds(l, 1), :].astype(jnp.float32) - zmax    # (1, mt)
        ge = zl >= z                                             # (d, mt)
        r = r + jnp.where(ge, 1.0, 0.0)
        cs = cs + jnp.where(ge, zl, 0.0)
        return r, cs

    zeros = jnp.zeros_like(z)
    if d <= _UNROLL_MAX:
        r, cs = zeros, zeros
        for l in range(d):                    # d is a compile-time constant
            r, cs = sweep_step(l, (r, cs))
    else:
        # Bounded instruction stream / compile time for large D.
        # TODO(synk): for D >~ 64 an iterative tau solve (bisection/Newton on
        # sum(relu(z - tau)) = 1) is ~5x fewer VPU ops, but only approximate;
        # the exact O(D^2) sweep is kept to match the reference bitwise-ish.
        r, cs = jax.lax.fori_loop(0, d, sweep_step, (zeros, zeros))

    supp = (1.0 + r * z) > cs
    # k >= 1 always holds for real lanes (the max element is in the support);
    # the clamp only keeps ragged/garbage lanes finite.
    k = jnp.maximum(jnp.max(jnp.where(supp, r, 0.0), axis=0, keepdims=True), 1.0)
    ssum = jnp.sum(jnp.where(supp, z, 0.0), axis=0, keepdims=True)
    tau = (ssum - 1.0) / k
    o_ref[...] = jnp.maximum(z - tau, 0.0).astype(o_ref.dtype)


# ---------------------------------------------------------------------------
# Wrapper
# ---------------------------------------------------------------------------

def _choose_mt(d: int, m: int, block_m: int) -> int:
    """Lane-tile width: a multiple of 128, bounded by vreg pressure and by the
    requirement that both v7x TensorCores get at least one tile."""
    dp = _round_up(d, 8)                       # sublane rows Mosaic allocates
    # ~6 live (dp, mt) f32 arrays (z, r, cs + temporaries) <= ~48 of 64 vregs.
    budget = max(128, ((48 * 8 * 128) // (6 * dp)) // 128 * 128)
    mt = min(_round_up(max(block_m, 128), 128), budget, _round_up(m, 128))
    if m > 128:                                # >= 2 tiles -> both TCs busy
        mt = min(mt, max(128, _round_up(-(-m // 2), 128)))
    return mt


def sparsemax(x, dim=-1, *, block_m=1024):
    """Forward pass of Sparsemax along `dim` (default -1), Pallas-TPU."""
    dim = dim % x.ndim
    xm = jnp.moveaxis(x, dim, -1)
    shp = xm.shape
    d = int(shp[-1])
    m = max(1, int(math.prod(shp[:-1])))

    # Lane-dense compute layout: logits D on sublanes, flattened batch M on
    # the 128-wide lane axis (dense vregs + unmasked lane-dense stores).
    # One XLA transpose in and one out; no pad and no output slice.
    # TODO(synk): fold these two transposes into the kernel (XLU vxpose on
    # natural (Mt, D) blocks) to remove the last un-pipelined HBM passes.
    zt = jnp.transpose(xm.reshape(m, d))                   # (d, m), caller dtype

    mt = _choose_mt(d, m, block_m)
    grid = (-(-m // mt),)                                  # ragged last tile OK

    cost = pl.CostEstimate(
        flops=m * d * (5 * d + 10),
        transcendentals=0,
        bytes_accessed=2 * d * m * x.dtype.itemsize,
    )

    out = pl.pallas_call(
        functools.partial(_sparsemax_kernel, d=d),
        out_shape=jax.ShapeDtypeStruct((d, m), x.dtype),
        grid=grid,
        in_specs=[pl.BlockSpec((d, mt), lambda i: (0, i))],
        out_specs=pl.BlockSpec((d, mt), lambda i: (0, i)),
        compiler_params=pltpu.CompilerParams(
            # M tiles are independent -> shard across v7x's two TensorCores.
            dimension_semantics=("parallel",),
            # Tiles are tiny (d * mt * itemsize, double-buffered) -- far under
            # every generation's VMEM; set the scoped limit explicitly anyway.
            vmem_limit_bytes=32 * 1024 * 1024,
        ),
        cost_estimate=cost,
    )(zt)

    y = jnp.transpose(out).reshape(shp)
    return jnp.moveaxis(y, -1, dim)


# ---------------------------------------------------------------------------
# Pure-JAX reference (mirrors the PyTorch sort/cumsum formulation)
# ---------------------------------------------------------------------------

def sparsemax_ref(x, dim=-1):
    xm = jnp.moveaxis(x, dim, -1).astype(jnp.float32)
    z = xm - jnp.max(xm, axis=-1, keepdims=True)
    zs = jnp.flip(jnp.sort(z, axis=-1), axis=-1)
    d = z.shape[-1]
    rng = jnp.arange(1, d + 1, dtype=jnp.float32)
    cum = jnp.cumsum(zs, axis=-1)
    is_gt = (1.0 + rng * zs) > cum
    k = jnp.max(jnp.where(is_gt, rng, 0.0), axis=-1, keepdims=True)
    tau = (jnp.sum(jnp.where(is_gt, zs, 0.0), axis=-1, keepdims=True) - 1.0) / k
    out = jnp.maximum(z - tau, 0.0)
    return jnp.moveaxis(out, -1, dim).astype(x.dtype)


if __name__ == "__main__":
    key = jax.random.PRNGKey(0)
    k1, k2 = jax.random.split(key)
    x = jax.random.normal(k1, (2, 4, 16, 16), dtype=jnp.float32)

    # Module default: dim = -1  (D=16 on sublanes, M=128 on lanes).
    y = jax.block_until_ready(sparsemax(x))
    assert y.shape == x.shape, y.shape
    assert bool(jnp.all(jnp.isfinite(y)))
    assert bool(jnp.all(y >= 0.0))
    assert bool(jnp.allclose(jnp.sum(y, axis=-1), 1.0, atol=1e-5))
    assert bool(jnp.allclose(y, sparsemax_ref(x), atol=1e-5, rtol=1e-5))

    # Non-default dim: D=4, M=512 -> two grid tiles (megacore path).
    y1 = jax.block_until_ready(sparsemax(x, dim=1))
    assert bool(jnp.allclose(y1, sparsemax_ref(x, dim=1), atol=1e-5, rtol=1e-5))

    # Unpadded / ragged shapes: D=11 (not a multiple of 8), M=35 (< 128).
    x2 = jax.random.normal(k2, (5, 7, 11), dtype=jnp.float32)
    y2 = jax.block_until_ready(sparsemax(x2))
    assert bool(jnp.all(jnp.isfinite(y2)))
    assert bool(jnp.allclose(y2, sparsemax_ref(x2), atol=1e-5, rtol=1e-5))

    # Caller dtype is kept end-to-end (bf16 stays bf16 through HBM).
    xb = x.astype(jnp.bfloat16)
    yb = jax.block_until_ready(sparsemax(xb))
    assert yb.dtype == jnp.bfloat16
    assert bool(jnp.allclose(yb.astype(jnp.float32),
                             sparsemax_ref(xb).astype(jnp.float32), atol=2e-2))

    print("KERNEL_OK")
</pallas_src>

<mosaic_0001>
module attributes {stable_mosaic.version = 11 : i64} {
  func.func @_sparsemax_kernel(%arg0: i32, %arg1: memref<16x128xf32, #tpu.memory_space<vmem>>, %arg2: memref<16x128xf32, #tpu.memory_space<vmem>>) attributes {dimension_semantics = [#tpu.dimension_semantics<parallel>], iteration_bounds = array<i64: 1>, scalar_prefetch = 0 : i64, scratch_operands = 0 : i64, tpu.core_type = #tpu.core_type<tc>, window_params = [{transform_indices = @transform_0, window_bounds = array<i64: 16, 128>}, {transform_indices = @transform_1, window_bounds = array<i64: 16, 128>}]} {
    %c0 = arith.constant 0 : index
    %c0_0 = arith.constant 0 : index
    %0 = vector.load %arg1[%c0, %c0_0] : memref<16x128xf32, #tpu.memory_space<vmem>>, vector<16x128xf32>
    %cst = arith.constant dense<0xFF800000> : vector<128xf32>
    %1 = vector.multi_reduction <maximumf>, %0, %cst [0] : vector<16x128xf32> to vector<128xf32>
    %2 = vector.shape_cast %1 : vector<128xf32> to vector<1x128xf32>
    %3 = vector.broadcast %2 : vector<1x128xf32> to vector<16x128xf32>
    %4 = arith.subf %0, %3 : vector<16x128xf32>
    %cst_1 = arith.constant 0.000000e+00 : f32
    %5 = vector.broadcast %cst_1 : f32 to vector<16x128xf32>
    %c0_2 = arith.constant 0 : index
    %c0_3 = arith.constant 0 : index
    %6 = vector.load %arg1[%c0_2, %c0_3] : memref<16x128xf32, #tpu.memory_space<vmem>>, vector<1x128xf32>
    %7 = arith.subf %6, %2 : vector<1x128xf32>
    %8 = vector.broadcast %7 : vector<1x128xf32> to vector<16x128xf32>
    %9 = arith.cmpf oge, %8, %4 : vector<16x128xf32>
    %cst_4 = arith.constant 1.000000e+00 : f32
    %cst_5 = arith.constant 0.000000e+00 : f32
    %10 = vector.broadcast %cst_4 : f32 to vector<16x128xf32>
    %11 = vector.broadcast %cst_5 : f32 to vector<16x128xf32>
    %12 = arith.select %9, %10, %11 : vector<16x128xi1>, vector<16x128xf32>
    %13 = arith.addf %5, %12 : vector<16x128xf32>
    %cst_6 = arith.constant 0.000000e+00 : f32
    %14 = vector.shape_cast %7 : vector<1x128xf32> to vector<1x128xf32>
    %15 = vector.broadcast %14 : vector<1x128xf32> to vector<16x128xf32>
    %16 = vector.broadcast %cst_6 : f32 to vector<16x128xf32>
    %17 = arith.select %9, %15, %16 : vector<16x128xi1>, vector<16x128xf32>
    %18 = arith.addf %5, %17 : vector<16x128xf32>
    %c1 = arith.constant 1 : index
    %c0_7 = arith.constant 0 : index
    %19 = vector.load %arg1[%c1, %c0_7] : memref<16x128xf32, #tpu.memory_space<vmem>>, vector<1x128xf32>
    %20 = arith.subf %19, %2 : vector<1x128xf32>
    %21 = vector.broadcast %20 : vector<1x128xf32> to vector<16x128xf32>
    %22 = arith.cmpf oge, %21, %4 : vector<16x128xf32>
    %cst_8 = arith.constant 1.000000e+00 : f32
    %cst_9 = arith.constant 0.000000e+00 : f32
    %23 = vector.broadcast %cst_8 : f32 to vector<16x128xf32>
    %24 = vector.broadcast %cst_9 : f32 to vector<16x128xf32>
    %25 = arith.select %22, %23, %24 : vector<16x128xi1>, vector<16x128xf32>
    %26 = arith.addf %13, %25 : vector<16x128xf32>
    %cst_10 = arith.constant 0.000000e+00 : f32
    %27 = vector.shape_cast %20 : vector<1x128xf32> to vector<1x128xf32>
    %28 = vector.broadcast %27 : vector<1x128xf32> to vector<16x128xf32>
    %29 = vector.broadcast %cst_10 : f32 to vector<16x128xf32>
    %30 = arith.select %22, %28, %29 : vector<16x128xi1>, vector<16x128xf32>
    %31 = arith.addf %18, %30 : vector<16x128xf32>
    %c2 = arith.constant 2 : index
    %c0_11 = arith.constant 0 : index
    %32 = vector.load %arg1[%c2, %c0_11] : memref<16x128xf32, #tpu.memory_space<vmem>>, vector<1x128xf32>
    %33 = arith.subf %32, %2 : vector<1x128xf32>
    %34 = vector.broadcast %33 : vector<1x128xf32> to vector<16x128xf32>
    %35 = arith.cmpf oge, %34, %4 : vector<16x128xf32>
    %cst_12 = arith.constant 1.000000e+00 : f32
    %cst_13 = arith.constant 0.000000e+00 : f32
    %36 = vector.broadcast %cst_12 : f32 to vector<16x128xf32>
    %37 = vector.broadcast %cst_13 : f32 to vector<16x128xf32>
    %38 = arith.select %35, %36, %37 : vector<16x128xi1>, vector<16x128xf32>
    %39 = arith.addf %26, %38 : vector<16x128xf32>
    %cst_14 = arith.constant 0.000000e+00 : f32
    %40 = vector.shape_cast %33 : vector<1x128xf32> to vector<1x128xf32>
    %41 = vector.broadcast %40 : vector<1x128xf32> to vector<16x128xf32>
    %42 = vector.broadcast %cst_14 : f32 to vector<16x128xf32>
    %43 = arith.select %35, %41, %42 : vector<16x128xi1>, vector<16x128xf32>
    %44 = arith.addf %31, %43 : vector<16x128xf32>
    %c3 = arith.constant 3 : index
    %c0_15 = arith.constant 0 : index
    %45 = vector.load %arg1[%c3, %c0_15] : memref<16x128xf32, #tpu.memory_space<vmem>>, vector<1x128xf32>
    %46 = arith.subf %45, %2 : vector<1x128xf32>
    %47 = vector.broadcast %46 : vector<1x128xf32> to vector<16x128xf32>
    %48 = arith.cmpf oge, %47, %4 : vector<16x128xf32>
    %cst_16 = arith.constant 1.000000e+00 : f32
    %cst_17 = arith.constant 0.000000e+00 : f32
    %49 = vector.broadcast %cst_16 : f32 to vector<16x128xf32>
    %50 = vector.broadcast %cst_17 : f32 to vector<16x128xf32>
    %51 = arith.select %48, %49, %50 : vector<16x128xi1>, vector<16x128xf32>
    %52 = arith.addf %39, %51 : vector<16x128xf32>
    %cst_18 = arith.constant 0.000000e+00 : f32
    %53 = vector.shape_cast %46 : vector<1x128xf32> to vector<1x128xf32>
    %54 = vector.broadcast %53 : vector<1x128xf32> to vector<16x128xf32>
    %55 = vector.broadcast %cst_18 : f32 to vector<16x128xf32>
    %56 = arith.select %48, %54, %55 : vector<16x128xi1>, vector<16x128xf32>
    %57 = arith.addf %44, %56 : vector<16x128xf32>
    %c4 = arith.constant 4 : index
    %c0_19 = arith.constant 0 : index
    %58 = vector.load %arg1[%c4, %c0_19] : memref<16x128xf32, #tpu.memory_space<vmem>>, vector<1x128xf32>
    %59 = arith.subf %58, %2 : vector<1x128xf32>
    %60 = vector.broadcast %59 : vector<1x128xf32> to vector<16x128xf32>
    %61 = arith.cmpf oge, %60, %4 : vector<16x128xf32>
    %cst_20 = arith.constant 1.000000e+00 : f32
    %cst_21 = arith.constant 0.000000e+00 : f32
    %62 = vector.broadcast %cst_20 : f32 to vector<16x128xf32>
    %63 = vector.broadcast %cst_21 : f32 to vector<16x128xf32>
    %64 = arith.select %61, %62, %63 : vector<16x128xi1>, vector<16x128xf32>
    %65 = arith.addf %52, %64 : vector<16x128xf32>
    %cst_22 = arith.constant 0.000000e+00 : f32
    %66 = vector.shape_cast %59 : vector<1x128xf32> to vector<1x128xf32>
    %67 = vector.broadcast %66 : vector<1x128xf32> to vector<16x128xf32>
    %68 = vector.broadcast %cst_22 : f32 to vector<16x128xf32>
    %69 = arith.select %61, %67, %68 : vector<16x128xi1>, vector<16x128xf32>
    %70 = arith.addf %57, %69 : vector<16x128xf32>
    %c5 = arith.constant 5 : index
    %c0_23 = arith.constant 0 : index
    %71 = vector.load %arg1[%c5, %c0_23] : memref<16x128xf32, #tpu.memory_space<vmem>>, vector<1x128xf32>
    %72 = arith.subf %71, %2 : vector<1x128xf32>
    %73 = vector.broadcast %72 : vector<1x128xf32> to vector<16x128xf32>
    %74 = arith.cmpf oge, %73, %4 : vector<16x128xf32>
    %cst_24 = arith.constant 1.000000e+00 : f32
    %cst_25 = arith.constant 0.000000e+00 : f32
    %75 = vector.broadcast %cst_24 : f32 to vector<16x128xf32>
    %76 = vector.broadcast %cst_25 : f32 to vector<16x128xf32>
    %77 = arith.select %74, %75, %76 : vector<16x128xi1>, vector<16x128xf32>
    %78 = arith.addf %65, %77 : vector<16x128xf32>
    %cst_26 = arith.constant 0.000000e+00 : f32
    %79 = vector.shape_cast %72 : vector<1x128xf32> to vector<1x128xf32>
    %80 = vector.broadcast %79 : vector<1x128xf32> to vector<16x128xf32>
    %81 = vector.broadcast %cst_26 : f32 to vector<16x128xf32>
    %82 = arith.select %74, %80, %81 : vector<16x128xi1>, vector<16x128xf32>
    %83 = arith.addf %70, %82 : vector<16x128xf32>
    %c6 = arith.constant 6 : index
    %c0_27 = arith.constant 0 : index
    %84 = vector.load %arg1[%c6, %c0_27] : memref<16x128xf32, #tpu.memory_space<vmem>>, vector<1x128xf32>
    %85 = arith.subf %84, %2 : vector<1x128xf32>
    %86 = vector.broadcast %85 : vector<1x128xf32> to vector<16x128xf32>
    %87 = arith.cmpf oge, %86, %4 : vector<16x128xf32>
    %cst_28 = arith.constant 1.000000e+00 : f32
    %cst_29 = arith.constant 0.000000e+00 : f32
    %88 = vector.broadcast %cst_28 : f32 to vector<16x128xf32>
    %89 = vector.broadcast %cst_29 : f32 to vector<16x128xf32>
    %90 = arith.select %87, %88, %89 : vector<16x128xi1>, vector<16x128xf32>
    %91 = arith.addf %78, %90 : vector<16x128xf32>
    %cst_30 = arith.constant 0.000000e+00 : f32
    %92 = vector.shape_cast %85 : vector<1x128xf32> to vector<1x128xf32>
    %93 = vector.broadcast %92 : vector<1x128xf32> to vector<16x128xf32>
    %94 = vector.broadcast %cst_30 : f32 to vector<16x128xf32>
    %95 = arith.select %87, %93, %94 : vector<16x128xi1>, vector<16x128xf32>
    %96 = arith.addf %83, %95 : vector<16x128xf32>
    %c7 = arith.constant 7 : index
    %c0_31 = arith.constant 0 : index
    %97 = vector.load %arg1[%c7, %c0_31] : memref<16x128xf32, #tpu.memory_space<vmem>>, vector<1x128xf32>
    %98 = arith.subf %97, %2 : vector<1x128xf32>
    %99 = vector.broadcast %98 : vector<1x128xf32> to vector<16x128xf32>
    %100 = arith.cmpf oge, %99, %4 : vector<16x128xf32>
    %cst_32 = arith.constant 1.000000e+00 : f32
    %cst_33 = arith.constant 0.000000e+00 : f32
    %101 = vector.broadcast %cst_32 : f32 to vector<16x128xf32>
    %102 = vector.broadcast %cst_33 : f32 to vector<16x128xf32>
    %103 = arith.select %100, %101, %102 : vector<16x128xi1>, vector<16x128xf32>
    %104 = arith.addf %91, %103 : vector<16x128xf32>
    %cst_34 = arith.constant 0.000000e+00 : f32
    %105 = vector.shape_cast %98 : vector<1x128xf32> to vector<1x128xf32>
    %106 = vector.broadcast %105 : vector<1x128xf32> to vector<16x128xf32>
    %107 = vector.broadcast %cst_34 : f32 to vector<16x128xf32>
    %108 = arith.select %100, %106, %107 : vector<16x128xi1>, vector<16x128xf32>
    %109 = arith.addf %96, %108 : vector<16x128xf32>
    %c8 = arith.constant 8 : index
    %c0_35 = arith.constant 0 : index
    %110 = vector.load %arg1[%c8, %c0_35] : memref<16x128xf32, #tpu.memory_space<vmem>>, vector<1x128xf32>
    %111 = arith.subf %110, %2 : vector<1x128xf32>
    %112 = vector.broadcast %111 : vector<1x128xf32> to vector<16x128xf32>
    %113 = arith.cmpf oge, %112, %4 : vector<16x128xf32>
    %cst_36 = arith.constant 1.000000e+00 : f32
    %cst_37 = arith.constant 0.000000e+00 : f32
    %114 = vector.broadcast %cst_36 : f32 to vector<16x128xf32>
    %115 = vector.broadcast %cst_37 : f32 to vector<16x128xf32>
    %116 = arith.select %113, %114, %115 : vector<16x128xi1>, vector<16x128xf32>
    %117 = arith.addf %104, %116 : vector<16x128xf32>
    %cst_38 = arith.constant 0.000000e+00 : f32
    %118 = vector.shape_cast %111 : vector<1x128xf32> to vector<1x128xf32>
    %119 = vector.broadcast %118 : vector<1x128xf32> to vector<16x128xf32>
    %120 = vector.broadcast %cst_38 : f32 to vector<16x128xf32>
    %121 = arith.select %113, %119, %120 : vector<16x128xi1>, vector<16x128xf32>
    %122 = arith.addf %109, %121 : vector<16x128xf32>
    %c9 = arith.constant 9 : index
    %c0_39 = arith.constant 0 : index
    %123 = vector.load %arg1[%c9, %c0_39] : memref<16x128xf32, #tpu.memory_space<vmem>>, vector<1x128xf32>
    %124 = arith.subf %123, %2 : vector<1x128xf32>
    %125 = vector.broadcast %124 : vector<1x128xf32> to vector<16x128xf32>
    %126 = arith.cmpf oge, %125, %4 : vector<16x128xf32>
    %cst_40 = arith.constant 1.000000e+00 : f32
    %cst_41 = arith.constant 0.000000e+00 : f32
    %127 = vector.broadcast %cst_40 : f32 to vector<16x128xf32>
    %128 = vector.broadcast %cst_41 : f32 to vector<16x128xf32>
    %129 = arith.select %126, %127, %128 : vector<16x128xi1>, vector<16x128xf32>
    %130 = arith.addf %117, %129 : vector<16x128xf32>
    %cst_42 = arith.constant 0.000000e+00 : f32
    %131 = vector.shape_cast %124 : vector<1x128xf32> to vector<1x128xf32>
    %132 = vector.broadcast %131 : vector<1x128xf32> to vector<16x128xf32>
    %133 = vector.broadcast %cst_42 : f32 to vector<16x128xf32>
    %134 = arith.select %126, %132, %133 : vector<16x128xi1>, vector<16x128xf32>
    %135 = arith.addf %122, %134 : vector<16x128xf32>
    %c10 = arith.constant 10 : index
    %c0_43 = arith.constant 0 : index
    %136 = vector.load %arg1[%c10, %c0_43] : memref<16x128xf32, #tpu.memory_space<vmem>>, vector<1x128xf32>
    %137 = arith.subf %136, %2 : vector<1x128xf32>
    %138 = vector.broadcast %137 : vector<1x128xf32> to vector<16x128xf32>
    %139 = arith.cmpf oge, %138, %4 : vector<16x128xf32>
    %cst_44 = arith.constant 1.000000e+00 : f32
    %cst_45 = arith.constant 0.000000e+00 : f32
    %140 = vector.broadcast %cst_44 : f32 to vector<16x128xf32>
    %141 = vector.broadcast %cst_45 : f32 to vector<16x128xf32>
    %142 = arith.select %139, %140, %141 : vector<16x128xi1>, vector<16x128xf32>
    %143 = arith.addf %130, %142 : vector<16x128xf32>
    %cst_46 = arith.constant 0.000000e+00 : f32
    %144 = vector.shape_cast %137 : vector<1x128xf32> to vector<1x128xf32>
    %145 = vector.broadcast %144 : vector<1x128xf32> to vector<16x128xf32>
    %146 = vector.broadcast %cst_46 : f32 to vector<16x128xf32>
    %147 = arith.select %139, %145, %146 : vector<16x128xi1>, vector<16x128xf32>
    %148 = arith.addf %135, %147 : vector<16x128xf32>
    %c11 = arith.constant 11 : index
    %c0_47 = arith.constant 0 : index
    %149 = vector.load %arg1[%c11, %c0_47] : memref<16x128xf32, #tpu.memory_space<vmem>>, vector<1x128xf32>
    %150 = arith.subf %149, %2 : vector<1x128xf32>
    %151 = vector.broadcast %150 : vector<1x128xf32> to vector<16x128xf32>
    %152 = arith.cmpf oge, %151, %4 : vector<16x128xf32>
    %cst_48 = arith.constant 1.000000e+00 : f32
    %cst_49 = arith.constant 0.000000e+00 : f32
    %153 = vector.broadcast %cst_48 : f32 to vector<16x128xf32>
    %154 = vector.broadcast %cst_49 : f32 to vector<16x128xf32>
    %155 = arith.select %152, %153, %154 : vector<16x128xi1>, vector<16x128xf32>
    %156 = arith.addf %143, %155 : vector<16x128xf32>
    %cst_50 = arith.constant 0.000000e+00 : f32
    %157 = vector.shape_cast %150 : vector<1x128xf32> to vector<1x128xf32>
    %158 = vector.broadcast %157 : vector<1x128xf32> to vector<16x128xf32>
    %159 = vector.broadcast %cst_50 : f32 to vector<16x128xf32>
    %160 = arith.select %152, %158, %159 : vector<16x128xi1>, vector<16x128xf32>
    %161 = arith.addf %148, %160 : vector<16x128xf32>
    %c12 = arith.constant 12 : index
    %c0_51 = arith.constant 0 : index
    %162 = vector.load %arg1[%c12, %c0_51] : memref<16x128xf32, #tpu.memory_space<vmem>>, vector<1x128xf32>
    %163 = arith.subf %162, %2 : vector<1x128xf32>
    %164 = vector.broadcast %163 : vector<1x128xf32> to vector<16x128xf32>
    %165 = arith.cmpf oge, %164, %4 : vector<16x128xf32>
    %cst_52 = arith.constant 1.000000e+00 : f32
    %cst_53 = arith.constant 0.000000e+00 : f32
    %166 = vector.broadcast %cst_52 : f32 to vector<16x128xf32>
    %167 = vector.broadcast %cst_53 : f32 to vector<16x128xf32>
    %168 = arith.select %165, %166, %167 : vector<16x128xi1>, vector<16x128xf32>
    %169 = arith.addf %156, %168 : vector<16x128xf32>
    %cst_54 = arith.constant 0.000000e+00 : f32
    %170 = vector.shape_cast %163 : vector<1x128xf32> to vector<1x128xf32>
    %171 = vector.broadcast %170 : vector<1x128xf32> to vector<16x128xf32>
    %172 = vector.broadcast %cst_54 : f32 to vector<16x128xf32>
    %173 = arith.select %165, %171, %172 : vector<16x128xi1>, vector<16x128xf32>
    %174 = arith.addf %161, %173 : vector<16x128xf32>
    %c13 = arith.constant 13 : index
    %c0_55 = arith.constant 0 : index
    %175 = vector.load %arg1[%c13, %c0_55] : memref<16x128xf32, #tpu.memory_space<vmem>>, vector<1x128xf32>
    %176 = arith.subf %175, %2 : vector<1x128xf32>
    %177 = vector.broadcast %176 : vector<1x128xf32> to vector<16x128xf32>
    %178 = arith.cmpf oge, %177, %4 : vector<16x128xf32>
    %cst_56 = arith.constant 1.000000e+00 : f32
    %cst_57 = arith.constant 0.000000e+00 : f32
    %179 = vector.broadcast %cst_56 : f32 to vector<16x128xf32>
    %180 = vector.broadcast %cst_57 : f32 to vector<16x128xf32>
    %181 = arith.select %178, %179, %180 : vector<16x128xi1>, vector<16x128xf32>
    %182 = arith.addf %169, %181 : vector<16x128xf32>
    %cst_58 = arith.constant 0.000000e+00 : f32
    %183 = vector.shape_cast %176 : vector<1x128xf32> to vector<1x128xf32>
    %184 = vector.broadcast %183 : vector<1x128xf32> to vector<16x128xf32>
    %185 = vector.broadcast %cst_58 : f32 to vector<16x128xf32>
    %186 = arith.select %178, %184, %185 : vector<16x128xi1>, vector<16x128xf32>
    %187 = arith.addf %174, %186 : vector<16x128xf32>
    %c14 = arith.constant 14 : index
    %c0_59 = arith.constant 0 : index
    %188 = vector.load %arg1[%c14, %c0_59] : memref<16x128xf32, #tpu.memory_space<vmem>>, vector<1x128xf32>
    %189 = arith.subf %188, %2 : vector<1x128xf32>
    %190 = vector.broadcast %189 : vector<1x128xf32> to vector<16x128xf32>
    %191 = arith.cmpf oge, %190, %4 : vector<16x128xf32>
    %cst_60 = arith.constant 1.000000e+00 : f32
    %cst_61 = arith.constant 0.000000e+00 : f32
    %192 = vector.broadcast %cst_60 : f32 to vector<16x128xf32>
    %193 = vector.broadcast %cst_61 : f32 to vector<16x128xf32>
    %194 = arith.select %191, %192, %193 : vector<16x128xi1>, vector<16x128xf32>
    %195 = arith.addf %182, %194 : vector<16x128xf32>
    %cst_62 = arith.constant 0.000000e+00 : f32
    %196 = vector.shape_cast %189 : vector<1x128xf32> to vector<1x128xf32>
    %197 = vector.broadcast %196 : vector<1x128xf32> to vector<16x128xf32>
    %198 = vector.broadcast %cst_62 : f32 to vector<16x128xf32>
    %199 = arith.select %191, %197, %198 : vector<16x128xi1>, vector<16x128xf32>
    %200 = arith.addf %187, %199 : vector<16x128xf32>
    %c15 = arith.constant 15 : index
    %c0_63 = arith.constant 0 : index
    %201 = vector.load %arg1[%c15, %c0_63] : memref<16x128xf32, #tpu.memory_space<vmem>>, vector<1x128xf32>
    %202 = arith.subf %201, %2 : vector<1x128xf32>
    %203 = vector.broadcast %202 : vector<1x128xf32> to vector<16x128xf32>
    %204 = arith.cmpf oge, %203, %4 : vector<16x128xf32>
    %cst_64 = arith.constant 1.000000e+00 : f32
    %cst_65 = arith.constant 0.000000e+00 : f32
    %205 = vector.broadcast %cst_64 : f32 to vector<16x128xf32>
    %206 = vector.broadcast %cst_65 : f32 to vector<16x128xf32>
    %207 = arith.select %204, %205, %206 : vector<16x128xi1>, vector<16x128xf32>
    %208 = arith.addf %195, %207 : vector<16x128xf32>
    %cst_66 = arith.constant 0.000000e+00 : f32
    %209 = vector.shape_cast %202 : vector<1x128xf32> to vector<1x128xf32>
    %210 = vector.broadcast %209 : vector<1x128xf32> to vector<16x128xf32>
    %211 = vector.broadcast %cst_66 : f32 to vector<16x128xf32>
    %212 = arith.select %204, %210, %211 : vector<16x128xi1>, vector<16x128xf32>
    %213 = arith.addf %200, %212 : vector<16x128xf32>
    %214 = arith.mulf %208, %4 : vector<16x128xf32>
    %cst_67 = arith.constant 1.000000e+00 : f32
    %215 = vector.broadcast %cst_67 : f32 to vector<16x128xf32>
    %216 = arith.addf %215, %214 : vector<16x128xf32>
    %217 = arith.cmpf ogt, %216, %213 : vector<16x128xf32>
    %cst_68 = arith.constant 0.000000e+00 : f32
    %218 = vector.broadcast %cst_68 : f32 to vector<16x128xf32>
    %219 = arith.select %217, %208, %218 : vector<16x128xi1>, vector<16x128xf32>
    %cst_69 = arith.constant dense<0xFF800000> : vector<128xf32>
    %220 = vector.multi_reduction <maximumf>, %219, %cst_69 [0] : vector<16x128xf32> to vector<128xf32>
    %221 = vector.shape_cast %220 : vector<128xf32> to vector<1x128xf32>
    %cst_70 = arith.constant 1.000000e+00 : f32
    %222 = vector.broadcast %cst_70 : f32 to vector<1x128xf32>
    %223 = arith.maximumf %221, %222 : vector<1x128xf32>
    %cst_71 = arith.constant 0.000000e+00 : f32
    %224 = vector.broadcast %cst_71 : f32 to vector<16x128xf32>
    %225 = arith.select %217, %4, %224 : vector<16x128xi1>, vector<16x128xf32>
    %cst_72 = arith.constant dense<0.000000e+00> : vector<128xf32>
    %226 = vector.multi_reduction <add>, %225, %cst_72 [0] : vector<16x128xf32> to vector<128xf32>
    %227 = vector.shape_cast %226 : vector<128xf32> to vector<1x128xf32>
    %cst_73 = arith.constant 1.000000e+00 : f32
    %228 = vector.broadcast %cst_73 : f32 to vector<1x128xf32>
    %229 = arith.subf %227, %228 : vector<1x128xf32>
    %230 = arith.divf %229, %223 : vector<1x128xf32>
    %231 = vector.broadcast %230 : vector<1x128xf32> to vector<16x128xf32>
    %232 = arith.subf %4, %231 : vector<16x128xf32>
    %cst_74 = arith.constant 0.000000e+00 : f32
    %233 = vector.broadcast %cst_74 : f32 to vector<16x128xf32>
    %234 = arith.maximumf %232, %233 : vector<16x128xf32>
    %c0_75 = arith.constant 0 : index
    %c0_76 = arith.constant 0 : index
    %235 = vector.load %arg2[%c0_75, %c0_76] : memref<16x128xf32, #tpu.memory_space<vmem>>, vector<16x128xf32>
    tpu.vector_store %arg2[%c0_75, %c0_76], %234 {strides = array<i32>} : memref<16x128xf32, #tpu.memory_space<vmem>>, vector<16x128xf32>,
    return
  }
  func.func @transform_0(%arg0: i32) -> (i32, i32) {
    %c0_i32 = arith.constant 0 : i32
    %c0_i32_0 = arith.constant 0 : i32
    return %c0_i32, %arg0 : i32, i32
  }
  func.func @transform_1(%arg0: i32) -> (i32, i32) {
    %c0_i32 = arith.constant 0 : i32
    %c0_i32_0 = arith.constant 0 : i32
    return %c0_i32, %arg0 : i32, i32
  }
}

</mosaic_0001>

<llo_original>
// kernel: tpu_custom_call.1
$region0: #{tpu_custom_call.1}
  #allocation0 [shape = 'u32[]', space=smem, size = 0x4, offset = 0x4, fixed_abs, tag = 'smem constant byte address 0x4 - core index']
  #allocation1 [shape = 'u32[144,128]{1,0:T(1,128)}', space=vmem, size = 0x12000, scoped, tag = 'internal scratch']
  %s0 = inlined_call_operand.hbm [shape: f32[16,128], index: 0, kind: input, shape index: {}]
  %s1 = inlined_call_operand.hbm [shape: f32[16,128], index: 1, kind: output, shape index: {}]
  %s2 = sld [smem:[#allocation0]]
  $region18: #{tpu_custom_call.1} parent=0
    _
  %s4 = ssub.s32 1, %s2
  %s5 = scalar_select 0, %s4, %s2
  $region1: #{tpu_custom_call.1} parent=0
    #allocation2 [shape = 'u8[8192]{0}', space=vmem, size = 0x2000, scoped, tag = 'input window, operand 0, single buffered']
    #allocation3 [shape = 's32[1]{0}', space=sflag, size = 0x4, scoped, tag = 'scoped memory for tpu_custom_call.1']
    #allocation4 [shape = 's32[1]{0}', space=sflag, size = 0x4, scoped, tag = 'scoped memory for tpu_custom_call.1']
    #allocation5 [shape = 'u8[8192]{0}', space=vmem, size = 0x2000, scoped, tag = 'output window, operand 0, single buffered']
    %6 = vsyncpa [#allocation3], 0
    %7 = vsyncpa [#allocation4], 0
    // Predicated region
    $region2: #{tpu_custom_call.1} parent=1 // pred_check
      _
    $region3: #{tpu_custom_call.1} parent=1 // pred_check_branch
      %9 = sbr.rel (0) target = $region5
    $region4: #{tpu_custom_call.1} parent=1 // pred_region
      %s11 = ssub.s32 256, 256
      %12 = vsyncadd [#allocation3], %s11
      %s13 = sshll.u32 [#allocation2], 4
      %s14 = int_to_ptr.vmem [resolvable:$true] %s13
      %19 = dma.hbm_to_vmem [thread:$0]  %s0, 256, %s14, [#allocation3], 128, 128, 8
    $region5: #{tpu_custom_call.1} parent=1 // pred_fallthru
      _
    // Predicated region
    $region6: #{tpu_custom_call.1} parent=1 // pred_check
      _
    $region7: #{tpu_custom_call.1} parent=1 // pred_check_branch
      %21 = sbr.rel (0) target = $region9
    $region8: #{tpu_custom_call.1} parent=1 // pred_region
      %22 = dma.done [#allocation3], 256
    $region9: #{tpu_custom_call.1} parent=1 // pred_fallthru
      _
    %v23 = vld [vmem:[#allocation2] sm:$0xff]
    %v24 = vld [vmem:[#allocation2 + $0x8] sm:$0xff]
    %v25 = vmax.f32 %v23, %v24
    %v26 = vrot.slane %v25, 4
    %v27 = vmax.f32 %v25, %v26
    %v28 = vrot.slane %v27, 2
    %v29 = vmax.f32 %v27, %v28
    %v30 = vrot.slane %v29, 1
    %v31 = vmax.f32 %v29, %v30
    %v32 = vsub.f32 %v23, %v31
    %v33 = vsub.f32 %v24, %v31
    %v34 = vld [vmem:[#allocation2] sm:$0x1]
    %v35 = vsub.f32 %v34, %v31
    %v36 = vlaneseq
    %v37 = vshrl.u32 %v36, 7
    %v38 = vsub.s32 0, %v37
    %v39 = vrot.slane %v35, %v38
    %vm40 = vcmp.ge.f32.partialorder %v39, %v32
    %vm41 = vcmp.ge.f32.partialorder %v39, %v33
    %v42 = vsel %vm40, 1.0, 0.0
    %v43 = vsel %vm41, 1.0, 0.0
    %v44 = vadd.f32 %v42, 0.0
    %v45 = vadd.f32 %v43, 0.0
    %v46 = vsel %vm40, %v39, 0.0
    %v47 = vsel %vm41, %v39, 0.0
    %v48 = vadd.f32 %v46, 0.0
    %v49 = vadd.f32 %v47, 0.0
    %v50 = vld [vmem:[#allocation2 + $0x1] sm:$0x1]
    %v51 = vsub.f32 %v50, %v31
    %v52 = vlaneseq
    %v53 = vshrl.u32 %v52, 7
    %v54 = vsub.s32 0, %v53
    %v55 = vrot.slane %v51, %v54
    %vm56 = vcmp.ge.f32.partialorder %v55, %v32
    %vm57 = vcmp.ge.f32.partialorder %v55, %v33
    %v58 = vsel %vm56, 1.0, 0.0
    %v59 = vsel %vm57, 1.0, 0.0
    %v60 = vadd.f32 %v44, %v58
    %v61 = vadd.f32 %v45, %v59
    %v62 = vsel %vm56, %v55, 0.0
    %v63 = vsel %vm57, %v55, 0.0
    %v64 = vadd.f32 %v48, %v62
    %v65 = vadd.f32 %v49, %v63
    %v66 = vld [vmem:[#allocation2 + $0x2] sm:$0x1]
    %v67 = vsub.f32 %v66, %v31
    %v68 = vlaneseq
    %v69 = vshrl.u32 %v68, 7
    %v70 = vsub.s32 0, %v69
    %v71 = vrot.slane %v67, %v70
    %vm72 = vcmp.ge.f32.partialorder %v71, %v32
    %vm73 = vcmp.ge.f32.partialorder %v71, %v33
    %v74 = vsel %vm72, 1.0, 0.0
    %v75 = vsel %vm73, 1.0, 0.0
    %v76 = vadd.f32 %v60, %v74
    %v77 = vadd.f32 %v61, %v75
    %v78 = vsel %vm72, %v71, 0.0
    %v79 = vsel %vm73, %v71, 0.0
    %v80 = vadd.f32 %v64, %v78
    %v81 = vadd.f32 %v65, %v79
    %v82 = vld [vmem:[#allocation2 + $0x3] sm:$0x1]
    %v83 = vsub.f32 %v82, %v31
    %v84 = vlaneseq
    %v85 = vshrl.u32 %v84, 7
    %v86 = vsub.s32 0, %v85
    %v87 = vrot.slane %v83, %v86
    %vm88 = vcmp.ge.f32.partialorder %v87, %v32
    %vm89 = vcmp.ge.f32.partialorder %v87, %v33
    %v90 = vsel %vm88, 1.0, 0.0
    %v91 = vsel %vm89, 1.0, 0.0
    %v92 = vadd.f32 %v76, %v90
    %v93 = vadd.f32 %v77, %v91
    %v94 = vsel %vm88, %v87, 0.0
    %v95 = vsel %vm89, %v87, 0.0
    %v96 = vadd.f32 %v80, %v94
    %v97 = vadd.f32 %v81, %v95
    %v98 = vld [vmem:[#allocation2 + $0x4] sm:$0x1]
    %v99 = vsub.f32 %v98, %v31
    %v100 = vlaneseq
    %v101 = vshrl.u32 %v100, 7
    %v102 = vsub.s32 0, %v101
    %v103 = vrot.slane %v99, %v102
    %vm104 = vcmp.ge.f32.partialorder %v103, %v32
    %vm105 = vcmp.ge.f32.partialorder %v103, %v33
    %v106 = vsel %vm104, 1.0, 0.0
    %v107 = vsel %vm105, 1.0, 0.0
    %v108 = vadd.f32 %v92, %v106
    %v109 = vadd.f32 %v93, %v107
    %v110 = vsel %vm104, %v103, 0.0
    %v111 = vsel %vm105, %v103, 0.0
    %v112 = vadd.f32 %v96, %v110
    %v113 = vadd.f32 %v97, %v111
    %v114 = vld [vmem:[#allocation2 + $0x5] sm:$0x1]
    %v115 = vsub.f32 %v114, %v31
    %v116 = vlaneseq
    %v117 = vshrl.u32 %v116, 7
    %v118 = vsub.s32 0, %v117
    %v119 = vrot.slane %v115, %v118
    %vm120 = vcmp.ge.f32.partialorder %v119, %v32
    %vm121 = vcmp.ge.f32.partialorder %v119, %v33
    %v122 = vsel %vm120, 1.0, 0.0
    %v123 = vsel %vm121, 1.0, 0.0
    %v124 = vadd.f32 %v108, %v122
    %v125 = vadd.f32 %v109, %v123
    %v126 = vsel %vm120, %v119, 0.0
    %v127 = vsel %vm121, %v119, 0.0
    %v128 = vadd.f32 %v112, %v126
    %v129 = vadd.f32 %v113, %v127
    %v130 = vld [vmem:[#allocation2 + $0x6] sm:$0x1]
    %v131 = vsub.f32 %v130, %v31
    %v132 = vlaneseq
    %v133 = vshrl.u32 %v132, 7
    %v134 = vsub.s32 0, %v133
    %v135 = vrot.slane %v131, %v134
    %vm136 = vcmp.ge.f32.partialorder %v135, %v32
    %vm137 = vcmp.ge.f32.partialorder %v135, %v33
    %v138 = vsel %vm136, 1.0, 0.0
    %v139 = vsel %vm137, 1.0, 0.0
    %v140 = vadd.f32 %v124, %v138
    %v141 = vadd.f32 %v125, %v139
    %v142 = vsel %vm136, %v135, 0.0
    %v143 = vsel %vm137, %v135, 0.0
    %v144 = vadd.f32 %v128, %v142
    %v145 = vadd.f32 %v129, %v143
    %v146 = vld [vmem:[#allocation2 + $0x7] sm:$0x1]
    %v147 = vsub.f32 %v146, %v31
    %v148 = vlaneseq
    %v149 = vshrl.u32 %v148, 7
    %v150 = vsub.s32 0, %v149
    %v151 = vrot.slane %v147, %v150
    %vm152 = vcmp.ge.f32.partialorder %v151, %v32
    %vm153 = vcmp.ge.f32.partialorder %v151, %v33
    %v154 = vsel %vm152, 1.0, 0.0
    %v155 = vsel %vm153, 1.0, 0.0
    %v156 = vadd.f32 %v140, %v154
    %v157 = vadd.f32 %v141, %v155
    %v158 = vsel %vm152, %v151, 0.0
    %v159 = vsel %vm153, %v151, 0.0
    %v160 = vadd.f32 %v144, %v158
    %v161 = vadd.f32 %v145, %v159
    %v162 = vld [vmem:[#allocation2 + $0x8] sm:$0x1]
    %v163 = vsub.f32 %v162, %v31
    %v164 = vlaneseq
    %v165 = vshrl.u32 %v164, 7
    %v166 = vsub.s32 0, %v165
    %v167 = vrot.slane %v163, %v166
    %vm168 = vcmp.ge.f32.partialorder %v167, %v32
    %vm169 = vcmp.ge.f32.partialorder %v167, %v33
    %v170 = vsel %vm168, 1.0, 0.0
    %v171 = vsel %vm169, 1.0, 0.0
    %v172 = vadd.f32 %v156, %v170
    %v173 = vadd.f32 %v157, %v171
    %v174 = vsel %vm168, %v167, 0.0
    %v175 = vsel %vm169, %v167, 0.0
    %v176 = vadd.f32 %v160, %v174
    %v177 = vadd.f32 %v161, %v175
    %v178 = vld [vmem:[#allocation2 + $0x9] sm:$0x1]
    %v179 = vsub.f32 %v178, %v31
    %v180 = vlaneseq
    %v181 = vshrl.u32 %v180, 7
    %v182 = vsub.s32 0, %v181
    %v183 = vrot.slane %v179, %v182
    %vm184 = vcmp.ge.f32.partialorder %v183, %v32
    %vm185 = vcmp.ge.f32.partialorder %v183, %v33
    %v186 = vsel %vm184, 1.0, 0.0
    %v187 = vsel %vm185, 1.0, 0.0
    %v188 = vadd.f32 %v172, %v186
    %v189 = vadd.f32 %v173, %v187
    %v190 = vsel %vm184, %v183, 0.0
    %v191 = vsel %vm185, %v183, 0.0
    %v192 = vadd.f32 %v176, %v190
    %v193 = vadd.f32 %v177, %v191
    %v194 = vld [vmem:[#allocation2 + $0xa] sm:$0x1]
    %v195 = vsub.f32 %v194, %v31
    %v196 = vlaneseq
    %v197 = vshrl.u32 %v196, 7
    %v198 = vsub.s32 0, %v197
    %v199 = vrot.slane %v195, %v198
    %vm200 = vcmp.ge.f32.partialorder %v199, %v32
    %vm201 = vcmp.ge.f32.partialorder %v199, %v33
    %v202 = vsel %vm200, 1.0, 0.0
    %v203 = vsel %vm201, 1.0, 0.0
    %v204 = vadd.f32 %v188, %v202
    %v205 = vadd.f32 %v189, %v203
    %v206 = vsel %vm200, %v199, 0.0
    %v207 = vsel %vm201, %v199, 0.0
    %v208 = vadd.f32 %v192, %v206
    %v209 = vadd.f32 %v193, %v207
    %v210 = vld [vmem:[#allocation2 + $0xb] sm:$0x1]
    %v211 = vsub.f32 %v210, %v31
    %v212 = vlaneseq
    %v213 = vshrl.u32 %v212, 7
    %v214 = vsub.s32 0, %v213
    %v215 = vrot.slane %v211, %v214
    %vm216 = vcmp.ge.f32.partialorder %v215, %v32
    %vm217 = vcmp.ge.f32.partialorder %v215, %v33
    %v218 = vsel %vm216, 1.0, 0.0
    %v219 = vsel %vm217, 1.0, 0.0
    %v220 = vadd.f32 %v204, %v218
    %v221 = vadd.f32 %v205, %v219
    %v222 = vsel %vm216, %v215, 0.0
    %v223 = vsel %vm217, %v215, 0.0
    %v224 = vadd.f32 %v208, %v222
    %v225 = vadd.f32 %v209, %v223
    %v226 = vld [vmem:[#allocation2 + $0xc] sm:$0x1]
    %v227 = vsub.f32 %v226, %v31
    %v228 = vlaneseq
    %v229 = vshrl.u32 %v228, 7
    %v230 = vsub.s32 0, %v229
    %v231 = vrot.slane %v227, %v230
    %vm232 = vcmp.ge.f32.partialorder %v231, %v32
    %vm233 = vcmp.ge.f32.partialorder %v231, %v33
    %v234 = vsel %vm232, 1.0, 0.0
    %v235 = vsel %vm233, 1.0, 0.0
    %v236 = vadd.f32 %v220, %v234
    %v237 = vadd.f32 %v221, %v235
    %v238 = vsel %vm232, %v231, 0.0
    %v239 = vsel %vm233, %v231, 0.0
    %v240 = vadd.f32 %v224, %v238
    %v241 = vadd.f32 %v225, %v239
    %v242 = vld [vmem:[#allocation2 + $0xd] sm:$0x1]
    %v243 = vsub.f32 %v242, %v31
    %v244 = vlaneseq
    %v245 = vshrl.u32 %v244, 7
    %v246 = vsub.s32 0, %v245
    %v247 = vrot.slane %v243, %v246
    %vm248 = vcmp.ge.f32.partialorder %v247, %v32
    %vm249 = vcmp.ge.f32.partialorder %v247, %v33
    %v250 = vsel %vm248, 1.0, 0.0
    %v251 = vsel %vm249, 1.0, 0.0
    %v252 = vadd.f32 %v236, %v250
    %v253 = vadd.f32 %v237, %v251
    %v254 = vsel %vm248, %v247, 0.0
    %v255 = vsel %vm249, %v247, 0.0
    %v256 = vadd.f32 %v240, %v254
    %v257 = vadd.f32 %v241, %v255
    %v258 = vld [vmem:[#allocation2 + $0xe] sm:$0x1]
    %v259 = vsub.f32 %v258, %v31
    %v260 = vlaneseq
    %v261 = vshrl.u32 %v260, 7
    %v262 = vsub.s32 0, %v261
    %v263 = vrot.slane %v259, %v262
    %vm264 = vcmp.ge.f32.partialorder %v263, %v32
    %vm265 = vcmp.ge.f32.partialorder %v263, %v33
    %v266 = vsel %vm264, 1.0, 0.0
    %v267 = vsel %vm265, 1.0, 0.0
    %v268 = vadd.f32 %v252, %v266
    %v269 = vadd.f32 %v253, %v267
    %v270 = vsel %vm264, %v263, 0.0
    %v271 = vsel %vm265, %v263, 0.0
    %v272 = vadd.f32 %v256, %v270
    %v273 = vadd.f32 %v257, %v271
    %v274 = vld [vmem:[#allocation2 + $0xf] sm:$0x1]
    %v275 = vsub.f32 %v274, %v31
    %v276 = vlaneseq
    %v277 = vshrl.u32 %v276, 7
    %v278 = vsub.s32 0, %v277
    %v279 = vrot.slane %v275, %v278
    %vm280 = vcmp.ge.f32.partialorder %v279, %v32
    %vm281 = vcmp.ge.f32.partialorder %v279, %v33
    %v282 = vsel %vm280, 1.0, 0.0
    %v283 = vsel %vm281, 1.0, 0.0
    %v284 = vadd.f32 %v268, %v282
    %v285 = vadd.f32 %v269, %v283
    %v286 = vsel %vm280, %v279, 0.0
    %v287 = vsel %vm281, %v279, 0.0
    %v288 = vadd.f32 %v272, %v286
    %v289 = vadd.f32 %v273, %v287
    %v290 = vmul.f32 %v284, %v32
    %v291 = vmul.f32 %v285, %v33
    %v292 = vadd.f32 %v290, 1.0
    %v293 = vadd.f32 %v291, 1.0
    %vm294 = vcmp.gt.f32.partialorder %v292, %v288
    %vm295 = vcmp.gt.f32.partialorder %v293, %v289
    %v296 = vsel %vm294, %v284, 0.0
    %v297 = vsel %vm295, %v285, 0.0
    %v298 = vmax.f32 %v296, %v297
    %v299 = vrot.slane %v298, 4
    %v300 = vmax.f32 %v298, %v299
    %v301 = vrot.slane %v300, 2
    %v302 = vmax.f32 %v300, %v301
    %v303 = vrot.slane %v302, 1
    %v304 = vmax.f32 %v302, %v303
    %v305 = vmax.f32 %v304, 1.0
    %v306 = vsel %vm294, %v32, 0.0
    %v307 = vsel %vm295, %v33, 0.0
    %v308 = vadd.f32 %v306, %v307
    %v309 = vrot.slane %v308, 4
    %v310 = vadd.f32 %v308, %v309
    %v311 = vrot.slane %v310, 2
    %v312 = vadd.f32 %v310, %v311
    %v313 = vrot.slane %v312, 1
    %v314 = vadd.f32 %v312, %v313
    %v315 = vsub.f32 %v314, 1.0
    %v316 = vrcp.pop %v305
    %v317 = vmul.f32 %v315, %v316
    %v318 = vsub.f32 %v32, %v317
    %v319 = vsub.f32 %v33, %v317
    %v320 = vmax.f32 %v318, 0.0
    %v321 = vmax.f32 %v319, 0.0
    %322 = vst [vmem:[#allocation5] sm:$0xff] %v320
    %323 = vst [vmem:[#allocation5 + $0x8] sm:$0xff] %v321
    // Predicated region
    $region10: #{tpu_custom_call.1} parent=1 // pred_check
      _
    $region11: #{tpu_custom_call.1} parent=1 // pred_check_branch
      %325 = sbr.rel (0) target = $region13
    $region12: #{tpu_custom_call.1} parent=1 // pred_region
      %s327 = ssub.s32 256, 256
      %328 = vsyncadd [#allocation4], %s327
      %s329 = sshll.u32 [#allocation5], 4
      %s330 = int_to_ptr.vmem [resolvable:$true] %s329
      %335 = dma.vmem_to_hbm [thread:$0]  %s330, 256, %s1, [#allocation4], 128, 128, 8
    $region13: #{tpu_custom_call.1} parent=1 // pred_fallthru
      _
    // Predicated region
    $region14: #{tpu_custom_call.1} parent=1 // pred_check
      _
    $region15: #{tpu_custom_call.1} parent=1 // pred_check_branch
      %337 = sbr.rel (0) target = $region17
    $region16: #{tpu_custom_call.1} parent=1 // pred_region
      %338 = dma.done [#allocation4], 256
    $region17: #{tpu_custom_call.1} parent=1 // pred_fallthru
      _
    %339 = vsyncpa [#allocation3], 1
    %340 = vsyncpa [#allocation4], 1

</llo_original>
